<compile_context>
chip_gen: v7x
topology: tpu7x:2x2x1
jax: 0.10.0
libtpu: 0.0.40
codegen_flags: <defaults>
</compile_context>

<pallas_src>
import functools

import numpy as np
import jax
import jax.numpy as jnp
from jax.experimental import pallas as pl
from jax.experimental.pallas import tpu as pltpu

NEG_SLOPE = 0.01   # nn.LeakyReLU default
BN_EPS = 1e-5      # nn.BatchNorm1d default
TV = 8             # voxel columns per scatter tile (compute is O(TV*TN*D))


def _round_up(a, b):
    return pl.cdiv(a, b) * b


def _point_tile(n, cap=4096):
    # Large lane-dense tiles (amortize the ~0.35us/step cost, near-roofline
    # DMAs) but keep >=2 tiles when possible so the "parallel" point axis can
    # be sharded across the two v7x TensorCores.
    half = _round_up(pl.cdiv(n, 2), 128)
    return int(max(128, min(cap, half)))


# ----------------------------------------------------------------------------
# MLP: Linear -> BN(batch stats) -> LeakyReLU -> Linear -> BN -> LeakyReLU
# Lane-dense (C, N) activation layout; two-pass BatchNorm via per-tile partial
# sum / sum-of-squares; h1 recomputed (never stored); h2 stored as bf16.
# ----------------------------------------------------------------------------
def _h1_from_x(x, wb, in_dim, c1, tn):
    # K = in_dim (=4) is far too small for the MXU: VPU broadcast FMAs.
    h = jnp.broadcast_to(wb[:, in_dim:in_dim + 1], (c1, tn))           # bias
    for c in range(in_dim):
        h = h + wb[:, c:c + 1] * x[c:c + 1, :]
    return h


def _masked_stats(h, tn, n_valid):
    col = jax.lax.broadcasted_iota(jnp.int32, (1, tn), 1) + pl.program_id(0) * tn
    valid = col < n_valid
    s = jnp.sum(jnp.where(valid, h, 0.0), axis=1, keepdims=True)        # (C,1)
    ss = jnp.sum(jnp.where(valid, h * h, 0.0), axis=1, keepdims=True)
    return jnp.concatenate([s, ss], axis=1)[None]                       # (1,C,2)


def _stats1_kernel(x_ref, wb_ref, st_ref, *, n_valid):
    """Pass A: read x only, emit BN1 partial stats (h1 is NOT written)."""
    in_dim, tn = x_ref.shape
    c1 = wb_ref.shape[0]
    h1 = _h1_from_x(x_ref[...], wb_ref[...], in_dim, c1, tn)
    st_ref[...] = _masked_stats(h1, tn, n_valid)


def _layer2_kernel(x_ref, wb1_ref, aff1_ref, wb2_ref, h2_ref, st_ref, *, n_valid):
    """Pass B: recompute h1 (4 FMAs), BN1 affine + LeakyReLU, Linear(16->C2);
    write h2 as bf16 and BN2 partial stats (computed from the f32 h2)."""
    in_dim, tn = x_ref.shape
    c1 = wb1_ref.shape[0]
    h1 = _h1_from_x(x_ref[...], wb1_ref[...], in_dim, c1, tn)
    aff1 = aff1_ref[...]                                                # (C1,2)
    a = h1 * aff1[:, 0:1] + aff1[:, 1:2]
    a = jnp.where(a >= 0, a, NEG_SLOPE * a)
    wb2 = wb2_ref[...]                                                  # (C2,C1+1)
    h2 = jnp.dot(wb2[:, :c1], a, preferred_element_type=jnp.float32) + wb2[:, c1:c1 + 1]
    st_ref[...] = _masked_stats(h2, tn, n_valid)                        # f32 stats
    h2_ref[...] = h2.astype(h2_ref.dtype)                               # bf16 store


def _bn2_kernel(h2_ref, aff_ref, o_ref):
    """Pass C: BN2 affine + LeakyReLU (bf16 in, f32 out)."""
    aff = aff_ref[...]
    y = h2_ref[...].astype(jnp.float32) * aff[:, 0:1] + aff[:, 1:2]
    o_ref[...] = jnp.where(y >= 0, y, NEG_SLOPE * y)


def _bn_affine(partial_stats, gamma, beta, n):
    """(n_tiles,C,2) partial sums -> per-channel packed (scale, shift) (C,2).
    Single-pass variance formula in f32: fine for post-activation magnitudes
    here; a shifted/compensated accumulation would be needed for very large
    means (noted from review)."""
    s = jnp.sum(partial_stats[:, :, 0], axis=0)
    ss = jnp.sum(partial_stats[:, :, 1], axis=0)
    mean = s / n
    var = jnp.maximum(ss / n - mean * mean, 0.0)   # biased var (train-mode BN)
    scale = gamma * jax.lax.rsqrt(var + BN_EPS)
    shift = beta - mean * scale
    return jnp.stack([scale, shift], axis=1).astype(jnp.float32)


def mlp_forward(x, params):
    """Returns the lane-dense (C2, n_pad) f32 activations (+ n)."""
    n, in_dim = x.shape
    c1 = params["wb1"].shape[0]
    c2 = params["wb2"].shape[0]
    tn = _point_tile(n)
    n_pad = _round_up(n, tn)
    n_tiles = n_pad // tn
    par = pltpu.CompilerParams(dimension_semantics=("parallel",))

    xT = jnp.pad(x, ((0, n_pad - n), (0, 0))).T                        # (in_dim, n_pad)

    # Pass A: BN1 partial stats only (no h1 round trip to HBM).
    st1 = pl.pallas_call(
        functools.partial(_stats1_kernel, n_valid=n),
        out_shape=jax.ShapeDtypeStruct((n_tiles, c1, 2), jnp.float32),
        grid=(n_tiles,),
        in_specs=[pl.BlockSpec((in_dim, tn), lambda i: (0, i)),
                  pl.BlockSpec((c1, in_dim + 1), lambda i: (0, 0))],
        out_specs=pl.BlockSpec((1, c1, 2), lambda i: (i, 0, 0)),
        compiler_params=par,
    )(xT, params["wb1"])
    aff1 = _bn_affine(st1, params["g1"], params["be1"], n)

    # Pass B: recompute h1, BN1+LeakyReLU, Linear2 -> h2 (bf16) + BN2 stats.
    h2, st2 = pl.pallas_call(
        functools.partial(_layer2_kernel, n_valid=n),
        out_shape=(jax.ShapeDtypeStruct((c2, n_pad), jnp.bfloat16),
                   jax.ShapeDtypeStruct((n_tiles, c2, 2), jnp.float32)),
        grid=(n_tiles,),
        in_specs=[pl.BlockSpec((in_dim, tn), lambda i: (0, i)),
                  pl.BlockSpec((c1, in_dim + 1), lambda i: (0, 0)),
                  pl.BlockSpec((c1, 2), lambda i: (0, 0)),
                  pl.BlockSpec((c2, c1 + 1), lambda i: (0, 0))],
        out_specs=(pl.BlockSpec((c2, tn), lambda i: (0, i)),
                   pl.BlockSpec((1, c2, 2), lambda i: (i, 0, 0))),
        compiler_params=par,
    )(xT, params["wb1"], aff1, params["wb2"])
    aff2 = _bn_affine(st2, params["g2"], params["be2"], n)

    # Pass C: BN2 affine + LeakyReLU -> final lane-dense features (f32).
    outT = pl.pallas_call(
        _bn2_kernel,
        out_shape=jax.ShapeDtypeStruct((c2, n_pad), jnp.float32),
        grid=(n_tiles,),
        in_specs=[pl.BlockSpec((c2, tn), lambda i: (0, i)),
                  pl.BlockSpec((c2, 2), lambda i: (0, 0))],
        out_specs=pl.BlockSpec((c2, tn), lambda i: (0, i)),
        compiler_params=par,
    )(h2, aff2)

    return outT, n


# ----------------------------------------------------------------------------
# Segment (voxel) max over points sorted by voxel id -- fully lane-dense.
# Grid = (voxel tiles, point tiles within this voxel tile's window); the
# window start AND length (in point tiles) are scalar-prefetched: HBM traffic
# is O(N) and compute is gated off past each voxel tile's own window.
# ----------------------------------------------------------------------------
def _scatter_max_kernel(ts_ref, win_ref, inv_ref, feat_ref, out_ref, *, tv):
    del ts_ref  # only used by the index_maps
    i = pl.program_id(0)
    j = pl.program_id(1)

    @pl.when(j == 0)
    def _():
        out_ref[...] = jnp.full(out_ref.shape, -jnp.inf, out_ref.dtype)

    @pl.when(j < win_ref[i])       # skip compute on clamped / out-of-window tiles
    def _():
        v0 = i * tv
        inv = inv_ref[...]         # (1, TN) int32, non-decreasing in-window
        feat = feat_ref[...]       # (D, TN) lane-dense
        cols = []
        for r in range(tv):
            hit = inv == (v0 + r)                          # (1, TN)
            cand = jnp.where(hit, feat, -jnp.inf)          # (D, TN)
            cols.append(jnp.max(cand, axis=1, keepdims=True))   # XLU lane reduce
        new = jnp.concatenate(cols, axis=1)                # (D, TV)
        out_ref[...] = jnp.maximum(out_ref[...], new[None])


def scatter_max_sorted(featT_sorted, seg_sorted, num_voxels,
                       tile_start, win, max_win, *, tn, tv=TV):
    d, n = featT_sorted.shape
    n_pad = _round_up(n, tn)
    n_pt = n_pad // tn
    v_pad = _round_up(num_voxels, tv)
    n_vt = v_pad // tv

    featT_p = jnp.pad(featT_sorted, ((0, 0), (0, n_pad - n)))
    inv_p = jnp.pad(seg_sorted.astype(jnp.int32), (0, n_pad - n),
                    constant_values=-1)[None, :]            # sentinel never matches

    def in_map(i, j, ts, wn):      # clamp keeps block index in range; compute is gated
        return (0, jnp.minimum(ts[i] + j, n_pt - 1))

    out = pl.pallas_call(
        functools.partial(_scatter_max_kernel, tv=tv),
        out_shape=jax.ShapeDtypeStruct((n_vt, d, tv), jnp.float32),
        grid_spec=pltpu.PrefetchScalarGridSpec(
            num_scalar_prefetch=2,
            grid=(n_vt, max_win),
            in_specs=[pl.BlockSpec((1, tn), in_map),
                      pl.BlockSpec((d, tn), in_map)],
            out_specs=pl.BlockSpec((1, d, tv), lambda i, j, ts, wn: (i, 0, 0)),
        ),
        compiler_params=pltpu.CompilerParams(
            dimension_semantics=("parallel", "arbitrary")),
    )(tile_start[:n_vt], win[:n_vt], inv_p, featT_p)

    # tiny (V, D) result: one cheap XLA transpose at the end
    return jnp.transpose(out, (0, 2, 1)).reshape(v_pad, d)[:num_voxels]


# ----------------------------------------------------------------------------
# VoxelInit module (JAX/Pallas)
# ----------------------------------------------------------------------------
class VoxelInitPallas:
    """The torch randperm shuffle + argsort recover is a semantic no-op
    (batch-stat BN and scatter-max are permutation invariant) and is skipped."""

    def __init__(self, in_dim, out_dim, spatial_shape, key):
        self.spatial_shape = spatial_shape
        self.in_dim = in_dim
        self.out_dim = out_dim
        hid = 16
        k1, k2, k3, k4 = jax.random.split(key, 4)
        lim1 = 1.0 / np.sqrt(in_dim)
        lim2 = 1.0 / np.sqrt(hid)
        w1 = jax.random.uniform(k1, (hid, in_dim), jnp.float32, -lim1, lim1)
        b1 = jax.random.uniform(k2, (hid,), jnp.float32, -lim1, lim1)
        w2 = jax.random.uniform(k3, (out_dim, hid), jnp.float32, -lim2, lim2)
        b2 = jax.random.uniform(k4, (out_dim,), jnp.float32, -lim2, lim2)
        # weight + bias packed per layer -> one parameter DMA per kernel
        self.params = {
            "wb1": jnp.concatenate([w1, b1[:, None]], axis=1),   # (16, in_dim+1)
            "g1": jnp.ones((hid,), jnp.float32),
            "be1": jnp.zeros((hid,), jnp.float32),
            "wb2": jnp.concatenate([w2, b2[:, None]], axis=1),   # (out, 17)
            "g2": jnp.ones((out_dim,), jnp.float32),
            "be2": jnp.zeros((out_dim,), jnp.float32),
        }

    def __call__(self, pc_list, pc_indices_list):
        # F.pad(pc_index, (1, 0), value=batch_id) + cat  ->  (N, 4) int rows
        pc = jnp.concatenate(pc_list, axis=0).astype(jnp.float32)
        batch_col = jnp.concatenate(
            [jnp.full((idx.shape[0], 1), b, jnp.int32)
             for b, idx in enumerate(pc_indices_list)], axis=0)
        idx_all = jnp.concatenate(pc_indices_list, axis=0).astype(jnp.int32)
        rows = jnp.concatenate([batch_col, idx_all], axis=1)
        n = rows.shape[0]

        # 1) dispatch MLP kernels first (async) so they overlap the sort below
        outT, _ = mlp_forward(pc, self.params)            # (C2, n_pad) lane-dense f32

        # 2) torch.unique(dim=0) on device: two-level int32 key (no overflow
        #    for production spatial shapes) + lexsort + neighbour-diff.
        sx, sy, sz = self.spatial_shape
        key_hi = rows[:, 0] * sx + rows[:, 1]             # (batch, x)
        key_lo = rows[:, 2] * sz + rows[:, 3]             # (y, z)
        order = jnp.lexsort((key_lo, key_hi))             # lexicographic row order
        hi_s, lo_s = key_hi[order], key_lo[order]
        is_new = jnp.concatenate(
            [jnp.ones((1,), jnp.bool_),
             (hi_s[1:] != hi_s[:-1]) | (lo_s[1:] != lo_s[:-1])])
        seg_sorted = jnp.cumsum(is_new.astype(jnp.int32)) - 1

        # 3) per-voxel-tile contiguous point windows (device), sized to V<=N
        tn_s = _point_tile(n, cap=1024)   # scatter compute scales with TV*TN*D
        n_pt = _round_up(n, tn_s) // tn_s
        n_vt_max = _round_up(n, TV) // TV
        vt_lo = jnp.arange(n_vt_max, dtype=jnp.int32) * TV
        starts = jnp.searchsorted(seg_sorted, vt_lo).astype(jnp.int32)
        ends = jnp.searchsorted(seg_sorted, vt_lo + TV).astype(jnp.int32)
        tile_start = jnp.clip(starts // tn_s, 0, n_pt - 1).astype(jnp.int32)
        win = jnp.maximum((ends + tn_s - 1) // tn_s - tile_start, 1).astype(jnp.int32)

        # 4) single host sync: unique count (output shape is data dependent)
        #    and rectangular inner grid extent, fetched together.
        num_voxels, max_win = (int(v) for v in
                               jax.device_get((jnp.sum(is_new), jnp.max(win))))

        # 5) scatter-max over sorted points, fed directly in lane-dense layout
        featT_sorted = outT[:, order]                     # lane-axis gather, no transpose
        voxel_feat = scatter_max_sorted(featT_sorted, seg_sorted, num_voxels,
                                        tile_start, win, max_win, tn=tn_s)

        first_idx = jnp.nonzero(is_new, size=num_voxels)[0]
        voxel_ind = rows[order[first_idx]]

        pc_feat = outT[:, :n].T                           # (N, C) built once, for return

        # TODO(synk): spconv.SparseConvTensor has no Pallas/JAX equivalent;
        # return its constituent fields (features, indices, spatial_shape, batch_size).
        x = (voxel_feat, voxel_ind, self.spatial_shape, len(pc_indices_list))
        return x, pc_feat, pc_indices_list


# ----------------------------------------------------------------------------
if __name__ == "__main__":
    key = jax.random.PRNGKey(0)
    k_mod, k_pc1, k_pc2, k_i1, k_i2 = jax.random.split(key, 5)

    in_dim, out_dim = 4, 32
    spatial_shape = (16, 16, 16)
    n1, n2 = 100, 150   # N=250 -> 2 point tiles: exercises padding / stat masking

    pc_list = [jax.random.normal(k_pc1, (n1, in_dim), jnp.float32),
               jax.random.normal(k_pc2, (n2, in_dim), jnp.float32)]
    pc_indices_list = [jax.random.randint(k_i1, (n1, 3), 0, 16, jnp.int32),
                       jax.random.randint(k_i2, (n2, 3), 0, 16, jnp.int32)]

    module = VoxelInitPallas(in_dim, out_dim, spatial_shape, k_mod)
    (voxel_feat, voxel_ind, sp_shape, bs), pc_feat, _ = module(pc_list, pc_indices_list)
    jax.block_until_ready((voxel_feat, voxel_ind, pc_feat))

    # ---- sanity check against a pure-JAX / numpy reference -----------------
    p = module.params
    w1, b1 = p["wb1"][:, :in_dim], p["wb1"][:, in_dim]
    w2, b2 = p["wb2"][:, :16], p["wb2"][:, 16]

    def bn_lrelu(h, g, be):
        m = h.mean(0)
        v = ((h - m) ** 2).mean(0)
        h = (h - m) / jnp.sqrt(v + BN_EPS) * g + be
        return jnp.where(h >= 0, h, NEG_SLOPE * h)

    x = jnp.concatenate(pc_list, axis=0)
    h = bn_lrelu(x @ w1.T + b1, p["g1"], p["be1"])
    ref_feat = bn_lrelu(h @ w2.T + b2, p["g2"], p["be2"])
    # h2 is carried between kernels as bf16 -> compare at bf16-level tolerance
    assert jnp.allclose(pc_feat, ref_feat, atol=3e-2), "MLP mismatch"

    batch_col = np.concatenate(
        [np.full((idx.shape[0], 1), b, np.int32)
         for b, idx in enumerate(pc_indices_list)], axis=0)
    rows_np = np.concatenate(
        [batch_col, np.asarray(jnp.concatenate(pc_indices_list, axis=0))], axis=1)
    uni, inv = np.unique(rows_np, axis=0, return_inverse=True)
    inv = inv.reshape(-1)
    assert np.array_equal(np.asarray(voxel_ind), uni), "unique mismatch"

    # scatter kernel consumes exactly the same f32 values as pc_feat -> tight check
    ref_vox = jax.ops.segment_max(pc_feat, jnp.asarray(inv),
                                  num_segments=uni.shape[0])
    assert jnp.allclose(voxel_feat, ref_vox, atol=1e-5), "scatter_max mismatch"

    print("KERNEL_OK")
</pallas_src>

<mosaic_0001>
module attributes {stable_mosaic.version = 11 : i64} {
  func.func @_stats1_kernel(%arg0: i32, %arg1: memref<4x128xf32, #tpu.memory_space<vmem>>, %arg2: memref<16x5xf32, #tpu.memory_space<vmem>>, %arg3: memref<1x16x2xf32, #tpu.memory_space<vmem>>) attributes {dimension_semantics = [#tpu.dimension_semantics<parallel>], iteration_bounds = array<i64: 2>, scalar_prefetch = 0 : i64, scratch_operands = 0 : i64, tpu.core_type = #tpu.core_type<tc>, window_params = [{transform_indices = @transform_0, window_bounds = array<i64: 4, 128>}, {pipeline_mode = #tpu.pipeline_mode<synchronous>, transform_indices = @transform_1, window_bounds = array<i64: 16, 5>}, {transform_indices = @transform_2, window_bounds = array<i64: 1, 16, 2>}]} {
    %c0 = arith.constant 0 : index
    %c0_0 = arith.constant 0 : index
    %0 = vector.load %arg1[%c0, %c0_0] : memref<4x128xf32, #tpu.memory_space<vmem>>, vector<4x128xf32>
    %c0_1 = arith.constant 0 : index
    %c0_2 = arith.constant 0 : index
    %1 = vector.load %arg2[%c0_1, %c0_2] : memref<16x5xf32, #tpu.memory_space<vmem>>, vector<16x5xf32>
    %2 = vector.extract_strided_slice %1 {offsets = [0, 4], sizes = [16, 1], strides = [1, 1]} : vector<16x5xf32> to vector<16x1xf32>
    %3 = vector.shape_cast %2 : vector<16x1xf32> to vector<16x1xf32>
    %4 = vector.broadcast %3 : vector<16x1xf32> to vector<16x128xf32>
    %5 = vector.extract_strided_slice %1 {offsets = [0, 0], sizes = [16, 1], strides = [1, 1]} : vector<16x5xf32> to vector<16x1xf32>
    %6 = vector.extract_strided_slice %0 {offsets = [0, 0], sizes = [1, 128], strides = [1, 1]} : vector<4x128xf32> to vector<1x128xf32>
    %7 = vector.broadcast %5 : vector<16x1xf32> to vector<16x128xf32>
    %8 = vector.broadcast %6 : vector<1x128xf32> to vector<16x128xf32>
    %9 = arith.mulf %7, %8 : vector<16x128xf32>
    %10 = arith.addf %4, %9 : vector<16x128xf32>
    %11 = vector.extract_strided_slice %1 {offsets = [0, 1], sizes = [16, 1], strides = [1, 1]} : vector<16x5xf32> to vector<16x1xf32>
    %12 = vector.extract_strided_slice %0 {offsets = [1, 0], sizes = [1, 128], strides = [1, 1]} : vector<4x128xf32> to vector<1x128xf32>
    %13 = vector.broadcast %11 : vector<16x1xf32> to vector<16x128xf32>
    %14 = vector.broadcast %12 : vector<1x128xf32> to vector<16x128xf32>
    %15 = arith.mulf %13, %14 : vector<16x128xf32>
    %16 = arith.addf %10, %15 : vector<16x128xf32>
    %17 = vector.extract_strided_slice %1 {offsets = [0, 2], sizes = [16, 1], strides = [1, 1]} : vector<16x5xf32> to vector<16x1xf32>
    %18 = vector.extract_strided_slice %0 {offsets = [2, 0], sizes = [1, 128], strides = [1, 1]} : vector<4x128xf32> to vector<1x128xf32>
    %19 = vector.broadcast %17 : vector<16x1xf32> to vector<16x128xf32>
    %20 = vector.broadcast %18 : vector<1x128xf32> to vector<16x128xf32>
    %21 = arith.mulf %19, %20 : vector<16x128xf32>
    %22 = arith.addf %16, %21 : vector<16x128xf32>
    %23 = vector.extract_strided_slice %1 {offsets = [0, 3], sizes = [16, 1], strides = [1, 1]} : vector<16x5xf32> to vector<16x1xf32>
    %24 = vector.extract_strided_slice %0 {offsets = [3, 0], sizes = [1, 128], strides = [1, 1]} : vector<4x128xf32> to vector<1x128xf32>
    %25 = vector.broadcast %23 : vector<16x1xf32> to vector<16x128xf32>
    %26 = vector.broadcast %24 : vector<1x128xf32> to vector<16x128xf32>
    %27 = arith.mulf %25, %26 : vector<16x128xf32>
    %28 = arith.addf %22, %27 : vector<16x128xf32>
    %29 = tpu.iota {dimensions = array<i32: 1>} : vector<1x128xi32>
    %c128_i32 = arith.constant 128 : i32
    %30 = arith.muli %arg0, %c128_i32 : i32
    %31 = vector.broadcast %30 : i32 to vector<1x128xi32>
    %32 = arith.addi %29, %31 : vector<1x128xi32>
    %c250_i32 = arith.constant 250 : i32
    %33 = vector.broadcast %c250_i32 : i32 to vector<1x128xi32>
    %34 = arith.cmpi slt, %32, %33 : vector<1x128xi32>
    %cst = arith.constant 0.000000e+00 : f32
    %35 = vector.shape_cast %34 : vector<1x128xi1> to vector<1x128xi1>
    %36 = vector.broadcast %35 : vector<1x128xi1> to vector<16x128xi1>
    %37 = vector.broadcast %cst : f32 to vector<16x128xf32>
    %38 = arith.select %36, %28, %37 : vector<16x128xi1>, vector<16x128xf32>
    %cst_3 = arith.constant dense<0.000000e+00> : vector<16xf32>
    %39 = vector.multi_reduction <add>, %38, %cst_3 [1] : vector<16x128xf32> to vector<16xf32>
    %40 = vector.shape_cast %39 : vector<16xf32> to vector<16x1xf32>
    %41 = arith.mulf %28, %28 : vector<16x128xf32>
    %cst_4 = arith.constant 0.000000e+00 : f32
    %42 = vector.shape_cast %34 : vector<1x128xi1> to vector<1x128xi1>
    %43 = vector.broadcast %42 : vector<1x128xi1> to vector<16x128xi1>
    %44 = vector.broadcast %cst_4 : f32 to vector<16x128xf32>
    %45 = arith.select %43, %41, %44 : vector<16x128xi1>, vector<16x128xf32>
    %cst_5 = arith.constant dense<0.000000e+00> : vector<16xf32>
    %46 = vector.multi_reduction <add>, %45, %cst_5 [1] : vector<16x128xf32> to vector<16xf32>
    %47 = vector.shape_cast %46 : vector<16xf32> to vector<16x1xf32>
    %48 = tpu.concatenate %40, %47 in 1 : vector<16x1xf32>, vector<16x1xf32> -> vector<16x2xf32>
    %49 = vector.shape_cast %48 : vector<16x2xf32> to vector<1x16x2xf32>
    %c0_6 = arith.constant 0 : index
    %c0_7 = arith.constant 0 : index
    %c0_8 = arith.constant 0 : index
    %50 = vector.load %arg3[%c0_6, %c0_7, %c0_8] : memref<1x16x2xf32, #tpu.memory_space<vmem>>, vector<1x16x2xf32>
    tpu.vector_store %arg3[%c0_6, %c0_7, %c0_8], %49 {strides = array<i32>} : memref<1x16x2xf32, #tpu.memory_space<vmem>>, vector<1x16x2xf32>,
    return
  }
  func.func @transform_0(%arg0: i32) -> (i32, i32) {
    %c0_i32 = arith.constant 0 : i32
    %c0_i32_0 = arith.constant 0 : i32
    return %c0_i32, %arg0 : i32, i32
  }
  func.func @transform_1(%arg0: i32) -> (i32, i32) {
    %c0_i32 = arith.constant 0 : i32
    %c0_i32_0 = arith.constant 0 : i32
    %c0_i32_1 = arith.constant 0 : i32
    return %c0_i32, %c0_i32_0 : i32, i32
  }
  func.func @transform_2(%arg0: i32) -> (i32, i32, i32) {
    %c0_i32 = arith.constant 0 : i32
    %c0_i32_0 = arith.constant 0 : i32
    %c0_i32_1 = arith.constant 0 : i32
    return %arg0, %c0_i32, %c0_i32_0 : i32, i32, i32
  }
}

</mosaic_0001>

<llo_original>
// kernel: tpu_custom_call.1
$region0: #{tpu_custom_call.1}
  #allocation0 [shape = 'u32[]', space=smem, size = 0x4, offset = 0x4, fixed_abs, tag = 'smem constant byte address 0x4 - core index']
  #allocation1 [shape = 'u32[144,128]{1,0:T(1,128)}', space=vmem, size = 0x12000, scoped, tag = 'internal scratch']
  %s0 = inlined_call_operand.vmem [shape: f32[4,256], index: 0, kind: input, shape index: {}]
  %s1 = inlined_call_operand.vmem [shape: f32[16,5], index: 1, kind: input, shape index: {}]
  %s2 = inlined_call_operand.vmem [shape: f32[2,16,2], index: 2, kind: output, shape index: {}]
  %s3 = sld [smem:[#allocation0]]
  $region41: #{tpu_custom_call.1} parent=0
    _
  %s5 = ssub.s32 1, %s3
  %s6 = scalar_select 0, %s5, %s3
  loop: start=0, step=1, limit=4
  $region2: #{tpu_custom_call.1} parent=0 // loop_pre_header
    _
  $region3: #{tpu_custom_call.1} parent=0 // loop_header
    %s8 = sphi 0, %s12
    %p9 = scmp.ge.s32.totalorder %s8, 4
    %s18 = sphi 0, %s20
    %s21 = sphi 0, %s18
    %s22 = sphi 0, %s21
    %s38 = sphi 0, %s22
    %s42 = sphi 0, %s42
    %s44 = sphi 0, %s42
    %s45 = sphi 0, %s44
    %s59 = sphi 0, %s45
    %s65 = sphi 0, %s67
    %s68 = sphi 0, %s65
    %s69 = sphi 0, %s68
    %s85 = sphi 0, %s69
  $region4: #{tpu_custom_call.1} parent=0 // loop_header_branch
    %11 = sbr.rel (%p9) target = $region8
  $region5: #{tpu_custom_call.1} parent=0 // loop_body
    %s13 = ssub.s32 %s8, 1
    %s14 = ssub.s32 %s8, 2
    %s15 = sadd.s32 %s8, 1
    %s16 = ssub.s32 %s8, %s15
    %p17 = scmp.eq.s32.totalorder %s16, 0
    %s19 = sadd.s32 %s18, 1
    %s20 = scalar_select %p17, %s18, %s19
    %p23 = pneg %p17
    %p24 = scmp.eq.s32.totalorder %s8, 1
    %p25 = por %p23, %p24
    %p26 = scmp.ne.s32.totalorder %s18, %s21
    %p27 = scmp.eq.s32.totalorder %s8, 0
    %p28 = por %p26, %p27
    %p29 = scmp.ne.s32.totalorder %s18, %s21
    %p30 = scmp.eq.s32.totalorder %s13, 1
    %p31 = por %p29, %p30
    %p32 = scmp.ne.s32.totalorder %s21, %s22
    %p33 = scmp.eq.s32.totalorder %s13, 0
    %p34 = por %p32, %p33
    %p35 = scmp.ne.s32.totalorder %s21, %s22
    %p36 = scmp.eq.s32.totalorder %s14, 1
    %p37 = por %p35, %p36
    %p39 = scmp.ne.s32.totalorder %s22, %s38
    %p40 = scmp.eq.s32.totalorder %s14, 0
    %p41 = por %p39, %p40
    %s43 = sadd.s32 %s42, 1
    %p46 = scmp.eq.s32.totalorder %s8, 1
    %p47 = scmp.ne.s32.totalorder %s42, %s44
    %p48 = scmp.eq.s32.totalorder %s8, 0
    %p49 = por %p47, %p48
    %p50 = scmp.ne.s32.totalorder %s42, %s44
    %p51 = scmp.eq.s32.totalorder %s13, 1
    %p52 = por %p50, %p51
    %p53 = scmp.ne.s32.totalorder %s44, %s45
    %p54 = scmp.eq.s32.totalorder %s13, 0
    %p55 = por %p53, %p54
    %p56 = scmp.ne.s32.totalorder %s44, %s45
    %p57 = scmp.eq.s32.totalorder %s14, 1
    %p58 = por %p56, %p57
    %p60 = scmp.ne.s32.totalorder %s45, %s59
    %p61 = scmp.eq.s32.totalorder %s14, 0
    %p62 = por %p60, %p61
    %s63 = ssub.s32 %s8, %s15
    %p64 = scmp.eq.s32.totalorder %s63, 0
    %s66 = sadd.s32 %s65, 1
    %s67 = scalar_select %p64, %s65, %s66
    %p70 = pneg %p64
    %p71 = scmp.eq.s32.totalorder %s8, 1
    %p72 = por %p70, %p71
    %p73 = scmp.ne.s32.totalorder %s65, %s68
    %p74 = scmp.eq.s32.totalorder %s8, 0
    %p75 = por %p73, %p74
    %p76 = scmp.ne.s32.totalorder %s65, %s68
    %p77 = scmp.eq.s32.totalorder %s13, 1
    %p78 = por %p76, %p77
    %p79 = scmp.ne.s32.totalorder %s68, %s69
    %p80 = scmp.eq.s32.totalorder %s13, 0
    %p81 = por %p79, %p80
    %p82 = scmp.ne.s32.totalorder %s68, %s69
    %p83 = scmp.eq.s32.totalorder %s14, 1
    %p84 = por %p82, %p83
    %p86 = scmp.ne.s32.totalorder %s69, %s85
    %p87 = scmp.eq.s32.totalorder %s14, 0
    %p88 = por %p86, %p87
    %p89 = scmp.le.s32.totalorder 1, %s8
    %p90 = scmp.lt.s32.totalorder %s8, 3
    %p91 = pnand %p89, %p90
    %p92 = pneg %p91
    // Predicated region
    $region9: #{tpu_custom_call.1} parent=5 // pred_check
      _
    $region10: #{tpu_custom_call.1} parent=5 // pred_check_branch
      %94 = sbr.rel (%p91) target = $region12
    $region11: #{tpu_custom_call.1} parent=5 // pred_region
      %s95 = ssub.s32 %s8, 1
      // Predicated region
      $region13: #{tpu_custom_call.1} parent=11 // pred_check
        %p96 = pneg %p55
      $region14: #{tpu_custom_call.1} parent=11 // pred_check_branch
        %98 = sbr.rel (%p96) target = $region16
      $region15: #{tpu_custom_call.1} parent=11 // pred_region
        _
      $region16: #{tpu_custom_call.1} parent=11 // pred_fallthru
        _
    $region12: #{tpu_custom_call.1} parent=5 // pred_fallthru
      _
    %p99 = scmp.lt.s32.totalorder %s8, 2
    // Predicated region
    $region17: #{tpu_custom_call.1} parent=5 // pred_check
      %p100 = pneg %p99
    $region18: #{tpu_custom_call.1} parent=5 // pred_check_branch
      %102 = sbr.rel (%p100) target = $region20
    $region19: #{tpu_custom_call.1} parent=5 // pred_region
      // Predicated region
      $region21: #{tpu_custom_call.1} parent=19 // pred_check
        %p103 = pneg %p28
      $region22: #{tpu_custom_call.1} parent=19 // pred_check_branch
        %105 = sbr.rel (%p103) target = $region24
      $region23: #{tpu_custom_call.1} parent=19 // pred_region
        %p106 = scmp.lt.s32.totalorder %s8, 1
        %s107 = scalar_select %p106, %s8, 1
        %s108 = smul.addr %s107, 4
        %s109 = scalar_lea.vmem %s0, %s108
      $region24: #{tpu_custom_call.1} parent=19 // pred_fallthru
        _
    $region20: #{tpu_custom_call.1} parent=5 // pred_fallthru
      _
    %p110 = scmp.le.s32.totalorder 1, %s8
    %p111 = scmp.lt.s32.totalorder %s8, 3
    %p112 = pnand %p110, %p111
    %p113 = pneg %p112
    // Predicated region
    $region25: #{tpu_custom_call.1} parent=5 // pred_check
      _
    $region26: #{tpu_custom_call.1} parent=5 // pred_check_branch
      %115 = sbr.rel (%p112) target = $region28
    $region27: #{tpu_custom_call.1} parent=5 // pred_region
      %s116 = ssub.s32 %s8, 1
      %p117 = scmp.lt.s32.totalorder %s13, 1
      %s118 = scalar_select %p117, %s13, 1
      %s119 = smul.addr %s118, 4
      %s120 = scalar_lea.vmem %s0, %s119
      %p121 = pneg %p34
      %p122 = pneg %p31
      %p123 = pneg %p55
      %p124 = pneg %p52
      %p125 = pneg %p81
      %p126 = pneg %p78
      %p127 = scmp.lt.s32.totalorder %s13, 1
      %s128 = scalar_select %p127, %s13, 1
      %s129 = smul.addr %s128, 2
      %s130 = smul.addr %s129, 8
      %s131 = scalar_lea.vmem %s2, %s130
      %p132 = scmp.lt.s32.totalorder %s13, 1
      %s133 = scalar_select %p132, %s13, 1
      %s134 = smul.addr %s133, 4
      %s135 = scalar_lea.vmem %s0, %s134
      %p136 = scmp.lt.s32.totalorder %s13, 1
      %s137 = scalar_select %p136, %s13, 1
      %s138 = smul.addr %s137, 2
      %s139 = smul.addr %s138, 8
      %s140 = scalar_lea.vmem %s2, %s139
      %v141 = vld [vmem:[%s135] sm:$0xf]
      %v142 = vld [vmem:[%s1] sm:$0xff]
      %v143 = vld [vmem:[%s1 + $0x8] sm:$0xff]
      %145 = vset.pattern.permute.xlu0 4
      %146 = vperm.xlu0 %145, %v142
      %v147 = vpop.permute.xlu0 %146
      %150 = vset.pattern.permute.xlu0 4
      %151 = vperm.xlu0 %150, %v143
      %v152 = vpop.permute.xlu0 %151
      %154 = vset.pattern.permute.xlu0 0
      %155 = vperm.xlu0 %154, %v142
      %v156 = vpop.permute.xlu0 %155
      %158 = vset.pattern.permute.xlu0 0
      %159 = vperm.xlu0 %158, %v143
      %v160 = vpop.permute.xlu0 %159
      %v162 = vlaneseq
      %v163 = vshrl.u32 %v162, 7
      %v164 = vsub.s32 0, %v163
      %v165 = vrot.slane %v141, %v164
      %v166 = vmul.f32 %v156, %v165
      %v167 = vmul.f32 %v160, %v165
      %v168 = vadd.f32 %v147, %v166
      %v169 = vadd.f32 %v152, %v167
      %170 = vset.pattern.permute.xlu0 1
      %171 = vperm.xlu0 %170, %v142
      %v172 = vpop.permute.xlu0 %171
      %174 = vset.pattern.permute.xlu0 1
      %175 = vperm.xlu0 %174, %v143
      %v176 = vpop.permute.xlu0 %175
      %v178 = vlaneseq
      %v179 = vshrl.u32 %v178, 7
      %v180 = vsub.s32 1, %v179
      %v181 = vrot.slane %v141, %v180
      %v182 = vmul.f32 %v172, %v181
      %v183 = vmul.f32 %v176, %v181
      %v184 = vadd.f32 %v168, %v182
      %v185 = vadd.f32 %v169, %v183
      %186 = vset.pattern.permute.xlu0 2
      %187 = vperm.xlu0 %186, %v142
      %v188 = vpop.permute.xlu0 %187
      %190 = vset.pattern.permute.xlu0 2
      %191 = vperm.xlu0 %190, %v143
      %v192 = vpop.permute.xlu0 %191
      %v194 = vlaneseq
      %v195 = vshrl.u32 %v194, 7
      %v196 = vsub.s32 2, %v195
      %v197 = vrot.slane %v141, %v196
      %v198 = vmul.f32 %v188, %v197
      %v199 = vmul.f32 %v192, %v197
      %v200 = vadd.f32 %v184, %v198
      %v201 = vadd.f32 %v185, %v199
      %202 = vset.pattern.permute.xlu0 3
      %203 = vperm.xlu0 %202, %v142
      %v204 = vpop.permute.xlu0 %203
      %206 = vset.pattern.permute.xlu0 3
      %207 = vperm.xlu0 %206, %v143
      %v208 = vpop.permute.xlu0 %207
      %v210 = vlaneseq
      %v211 = vshrl.u32 %v210, 7
      %v212 = vsub.s32 3, %v211
      %v213 = vrot.slane %v141, %v212
      %v214 = vmul.f32 %v204, %v213
      %v215 = vmul.f32 %v208, %v213
      %v216 = vadd.f32 %v200, %v214
      %v217 = vadd.f32 %v201, %v215
      %v218 = vlaneseq
      %v219 = vand.u32 %v218, 127
      %s220 = smul.u32 %s13, 128
      %v221 = vstv %s220
      %v222 = vadd.s32 %v219, %v221
      %vm223 = vcmp.lt.s32.totalorder %v222, 250
      %v224 = vsel %vm223, 1, 0
      %vm225 = vcmp.eq.s32.totalorder %v224, 1
      %v226 = vsel %vm225, %v216, 0.0
      %v227 = vsel %vm225, %v217, 0.0
      %228 = vadd.xlane.f32.xlu0 %v226
      %v229 = vpop.xlane.xlu0 %228
      %230 = vadd.xlane.f32.xlu0 %v227
      %v231 = vpop.xlane.xlu0 %230
      %v232 = vmul.f32 %v216, %v216
      %v233 = vmul.f32 %v217, %v217
      %v234 = vsel %vm225, %v232, 0.0
      %v235 = vsel %vm225, %v233, 0.0
      %236 = vadd.xlane.f32.xlu0 %v234
      %v237 = vpop.xlane.xlu0 %236
      %238 = vadd.xlane.f32.xlu0 %v235
      %v239 = vpop.xlane.xlu0 %238
      %vm240 = vcmask 7168
      %v241 = vsel %vm240, %v229, %v237
      %v242 = vsel %vm240, %v231, %v239
      %vm243 = vcmask 15360
      %244 = vst.msk [vmem:[%s140] sm:$0xff] %vm243, %v241
      %245 = vst.msk [vmem:[%s140 + $0x8] sm:$0xff] %vm243, %v242
      %p246 = scmp.lt.s32.totalorder %s13, 1
      %s247 = scalar_select %p246, %s13, 1
      %s248 = smul.addr %s247, 2
      %s249 = smul.addr %s248, 8
      %s250 = scalar_lea.vmem %s2, %s249
      // Predicated region
      $region29: #{tpu_custom_call.1} parent=27 // pred_check
        %p251 = pneg %p78
      $region30: #{tpu_custom_call.1} parent=27 // pred_check_branch
        %253 = sbr.rel (%p251) target = $region32
      $region31: #{tpu_custom_call.1} parent=27 // pred_region
        _
      $region32: #{tpu_custom_call.1} parent=27 // pred_fallthru
        _
    $region28: #{tpu_custom_call.1} parent=5 // pred_fallthru
      _
    %p254 = scmp.le.s32.totalorder 2, %s8
    // Predicated region
    $region33: #{tpu_custom_call.1} parent=5 // pred_check
      %p255 = pneg %p254
    $region34: #{tpu_custom_call.1} parent=5 // pred_check_branch
      %257 = sbr.rel (%p255) target = $region36
    $region35: #{tpu_custom_call.1} parent=5 // pred_region
      %s258 = ssub.s32 %s8, 2
      // Predicated region
      $region37: #{tpu_custom_call.1} parent=35 // pred_check
        %p259 = pneg %p84
      $region38: #{tpu_custom_call.1} parent=35 // pred_check_branch
        %261 = sbr.rel (%p259) target = $region40
      $region39: #{tpu_custom_call.1} parent=35 // pred_region
        %p262 = scmp.lt.s32.totalorder %s14, 1
        %s263 = scalar_select %p262, %s14, 1
        %s264 = smul.addr %s263, 2
        %s265 = smul.addr %s264, 8
        %s266 = scalar_lea.vmem %s2, %s265
      $region40: #{tpu_custom_call.1} parent=35 // pred_fallthru
        _
    $region36: #{tpu_custom_call.1} parent=5 // pred_fallthru
      _
  $region6: #{tpu_custom_call.1} parent=0 // loop_footer
    %s12 = sadd.s32 1, %s8
  $region7: #{tpu_custom_call.1} parent=0 // loop_footer_branch
    %7 = sbr.rel target = $region3
  $region8: #{tpu_custom_call.1} parent=0 // loop_exit
    _

</llo_original>
